<compile_context>
chip_gen: v6e
topology: v6e:2x2x1
jax: 0.10.0
libtpu: 0.0.40
codegen_flags: <defaults>
</compile_context>

<pallas_src>
import functools

import jax
import jax.numpy as jnp
from jax.experimental import pallas as pl
from jax.experimental.pallas import tpu as pltpu

_LANE = 128
_SUBLANE = 8
_MAX_TB = 8192                      # sweep 2048 / 4096 / 8192 per chip; 8192 keeps
                                    # double-buffered x+out well under the VMEM limit
_VMEM_LIMIT = 48 * 1024 * 1024      # safe on v7x (64 MiB/TC); plenty of headroom on v5e/v6e


def _round_up(n, m):
    return ((n + m - 1) // m) * m


def _coeffs_rational_kernel(x_ref, w_ref, o_ref, *, f_pad, n_features, approx):
    # x_ref: (TB, K)   w_ref: (K, 2*f_pad)   o_ref: (TB, n_features)   -- all f32
    # One MXU pass produces both numerator and denominator (lane-aligned halves).
    y = jnp.dot(x_ref[...], w_ref[...], preferred_element_type=jnp.float32)
    num = y[:, :f_pad]                    # lane-tile-aligned slice
    den = y[:, f_pad:] + 1.0              # lane-tile-aligned slice
    if approx:
        res = num * pl.reciprocal(den, approx=True)   # EUP slot, free when DMA-bound
    else:
        res = num / den                                # exact, matches torch semantics
    o_ref[...] = res[:, :n_features]      # narrow (masked) store; DMA bytes = real output only


def prepare_weights(w_num, w_den):
    """Build the fused weight once (call at init, reuse across forward calls).

    w_num: (F, K)    -- nn.Linear(n_combinations, n_features).weight layout
    w_den: (F, K-1)  -- nn.Linear(n_combinations-1, n_features).weight layout
    returns (w_cat: (K, 2*f_pad) float32, f_pad)
    """
    w_num = jnp.asarray(w_num, jnp.float32)
    w_den = jnp.asarray(w_den, jnp.float32)
    F, K = w_num.shape
    f_pad = _round_up(F, _LANE)           # dynamic: supports n_features > 128

    wn_t = w_num.T                                                    # (K, F)
    wd_t = jnp.concatenate(
        [jnp.zeros((1, F), jnp.float32), w_den.T], axis=0)            # (K, F), row-0 zero
    wn_p = jnp.pad(wn_t, ((0, 0), (0, f_pad - F)))
    wd_p = jnp.pad(wd_t, ((0, 0), (0, f_pad - F)))
    # Padded denominator columns give d1 = 0 -> denominator 1 (no div-by-zero);
    # padded numerator columns give 0.  Neither is ever stored (we store only F cols).
    return jnp.concatenate([wn_p, wd_p], axis=1), f_pad               # (K, 2*f_pad)


def coeffs_rational_apply(x, w_cat, n_features, f_pad, *,
                          max_tb=_MAX_TB, use_approx_reciprocal=False):
    """x: (B, K) float32, (w_cat, f_pad) from prepare_weights."""
    x = jnp.asarray(x, jnp.float32)
    B, K = x.shape

    # Big sublane-aligned batch tiles; ragged last block handled by Pallas (no jnp.pad pass).
    TB = min(max_tb, _round_up(B, _SUBLANE))
    grid = (pl.cdiv(B, TB),)

    out = pl.pallas_call(
        functools.partial(
            _coeffs_rational_kernel,
            f_pad=f_pad, n_features=n_features, approx=use_approx_reciprocal),
        out_shape=jax.ShapeDtypeStruct((B, n_features), jnp.float32),
        grid=grid,
        in_specs=[
            pl.BlockSpec((TB, K), lambda i: (i, 0)),          # batch-tiled input (double-buffered)
            pl.BlockSpec((K, 2 * f_pad), lambda i: (0, 0)),   # weights stay VMEM-resident
        ],
        out_specs=pl.BlockSpec((TB, n_features), lambda i: (i, 0)),
        compiler_params=pltpu.CompilerParams(
            dimension_semantics=("parallel",),
            vmem_limit_bytes=_VMEM_LIMIT,
        ),
    )(x, w_cat)
    return out


def coeffs_dictionary_rational(x, w_num, w_den, *, use_approx_reciprocal=False):
    """Convenience one-shot wrapper matching the PyTorch module forward.

    x:     (B, n_combinations)           float32
    w_num: (n_features, n_combinations)
    w_den: (n_features, n_combinations-1)
    returns (B, n_features) float32
    """
    n_features = w_num.shape[0]
    w_cat, f_pad = prepare_weights(w_num, w_den)
    return coeffs_rational_apply(x, w_cat, n_features, f_pad,
                                 use_approx_reciprocal=use_approx_reciprocal)


if __name__ == "__main__":
    # Small shapes consistent with the module's forward: x is (batch, n_combinations).
    batch, n_combinations, n_features = 8, 16, 4

    key = jax.random.PRNGKey(0)
    kx, kn, kd = jax.random.split(key, 3)

    x = jax.random.normal(kx, (batch, n_combinations), dtype=jnp.float32)
    # NOTE: the PyTorch __init__ zeros these weights; we use deterministic random
    # values so the kernel computes something non-trivial.
    w_num = 0.1 * jax.random.normal(kn, (n_features, n_combinations), dtype=jnp.float32)
    w_den = 0.1 * jax.random.normal(kd, (n_features, n_combinations - 1), dtype=jnp.float32)

    out = coeffs_dictionary_rational(x, w_num, w_den)
    out = jax.block_until_ready(out)

    # Pure-JAX reference check of the exact PyTorch semantics.
    ref = (x @ w_num.T) / ((x[:, 1:] @ w_den.T) + 1.0)
    assert out.shape == (batch, n_features)
    assert jnp.allclose(out, ref, atol=1e-5, rtol=1e-5), "mismatch vs reference"

    print("KERNEL_OK")
</pallas_src>

<mosaic_0001>
module attributes {stable_mosaic.version = 11 : i64} {
  func.func @_coeffs_rational_kernel(%arg0: i32, %arg1: memref<8x16xf32, #tpu.memory_space<vmem>>, %arg2: memref<16x256xf32, #tpu.memory_space<vmem>>, %arg3: memref<8x4xf32, #tpu.memory_space<vmem>>) attributes {dimension_semantics = [#tpu.dimension_semantics<parallel>], iteration_bounds = array<i64: 1>, scalar_prefetch = 0 : i64, scratch_operands = 0 : i64, tpu.core_type = #tpu.core_type<tc>, window_params = [{transform_indices = @transform_0, window_bounds = array<i64: 8, 16>}, {pipeline_mode = #tpu.pipeline_mode<synchronous>, transform_indices = @transform_1, window_bounds = array<i64: 16, 256>}, {transform_indices = @transform_2, window_bounds = array<i64: 8, 4>}]} {
    %c0 = arith.constant 0 : index
    %c0_0 = arith.constant 0 : index
    %0 = vector.load %arg1[%c0, %c0_0] : memref<8x16xf32, #tpu.memory_space<vmem>>, vector<8x16xf32>
    %c0_1 = arith.constant 0 : index
    %c0_2 = arith.constant 0 : index
    %1 = vector.load %arg2[%c0_1, %c0_2] : memref<16x256xf32, #tpu.memory_space<vmem>>, vector<16x256xf32>
    %cst = arith.constant dense<0.000000e+00> : vector<8x256xf32>
    %2 = tpu.matmul %0, %1, %cst {dimension_numbers = #tpu.dot_dimension_numbers<[1], [0], [0], [1], [0, 0, 1, 1], [], []>} : vector<8x16xf32>, vector<16x256xf32>, vector<8x256xf32> -> vector<8x256xf32>
    %3 = vector.extract_strided_slice %2 {offsets = [0, 0], sizes = [8, 128], strides = [1, 1]} : vector<8x256xf32> to vector<8x128xf32>
    %4 = vector.extract_strided_slice %2 {offsets = [0, 128], sizes = [8, 128], strides = [1, 1]} : vector<8x256xf32> to vector<8x128xf32>
    %cst_3 = arith.constant 1.000000e+00 : f32
    %5 = vector.broadcast %cst_3 : f32 to vector<8x128xf32>
    %6 = arith.addf %4, %5 : vector<8x128xf32>
    %7 = arith.divf %3, %6 : vector<8x128xf32>
    %8 = vector.extract_strided_slice %7 {offsets = [0, 0], sizes = [8, 4], strides = [1, 1]} : vector<8x128xf32> to vector<8x4xf32>
    %c0_4 = arith.constant 0 : index
    %c0_5 = arith.constant 0 : index
    %9 = vector.load %arg3[%c0_4, %c0_5] : memref<8x4xf32, #tpu.memory_space<vmem>>, vector<8x4xf32>
    tpu.vector_store %arg3[%c0_4, %c0_5], %8 {strides = array<i32>} : memref<8x4xf32, #tpu.memory_space<vmem>>, vector<8x4xf32>,
    return
  }
  func.func @transform_0(%arg0: i32) -> (i32, i32) {
    %c0_i32 = arith.constant 0 : i32
    %c0_i32_0 = arith.constant 0 : i32
    return %arg0, %c0_i32 : i32, i32
  }
  func.func @transform_1(%arg0: i32) -> (i32, i32) {
    %c0_i32 = arith.constant 0 : i32
    %c0_i32_0 = arith.constant 0 : i32
    %c0_i32_1 = arith.constant 0 : i32
    return %c0_i32, %c0_i32_0 : i32, i32
  }
  func.func @transform_2(%arg0: i32) -> (i32, i32) {
    %c0_i32 = arith.constant 0 : i32
    %c0_i32_0 = arith.constant 0 : i32
    return %arg0, %c0_i32 : i32, i32
  }
}

</mosaic_0001>

<llo_original>
// kernel: tpu_custom_call.1
$region0: #{tpu_custom_call.1}
  #allocation0 [shape = 'u32[]', space=smem, size = 0x4, offset = 0x4, fixed_abs, tag = 'smem constant byte address 0x4 - core index']
  #allocation1 [shape = 'u32[144,128]{1,0:T(1,128)}', space=vmem, size = 0x12000, scoped, tag = 'internal scratch']
  %s0 = inlined_call_operand.hbm [shape: f32[8,16], index: 0, kind: input, shape index: {}]
  %s1 = inlined_call_operand.hbm [shape: f32[16,256], index: 1, kind: input, shape index: {}]
  %s2 = inlined_call_operand.vmem [shape: f32[8,4], index: 2, kind: output, shape index: {}]
  %s3 = sld [smem:[#allocation0]]
  $region26: #{tpu_custom_call.1} parent=0
    _
  %s5 = ssub.s32 1, %s3
  %s6 = scalar_select 0, %s5, %s3
  $region1: #{tpu_custom_call.1} parent=0
    #allocation2 [shape = 'u8[4096]{0}', space=vmem, size = 0x1000, scoped, tag = 'input window, operand 0, single buffered']
    #allocation3 [shape = 's32[1]{0}', space=sflag, size = 0x4, scoped, tag = 'scoped memory for tpu_custom_call.1']
    #allocation4 [shape = 'u8[16384]{0}', space=vmem, size = 0x4000, scoped, tag = 'input window, operand 1, single buffered']
    #allocation5 [shape = 's32[1]{0}', space=sflag, size = 0x4, scoped, tag = 'scoped memory for tpu_custom_call.1']
    %7 = vsyncpa [#allocation3], 0
    %8 = vsyncpa [#allocation5], 0
    // Predicated region
    $region2: #{tpu_custom_call.1} parent=1 // pred_check
      _
    $region3: #{tpu_custom_call.1} parent=1 // pred_check_branch
      %10 = sbr.rel (0) target = $region5
    $region4: #{tpu_custom_call.1} parent=1 // pred_region
      %s12 = ssub.s32 128, 128
      %13 = vsyncadd [#allocation3], %s12
      %s15 = sshll.u32 [#allocation2], 4
      %s16 = int_to_ptr.vmem [resolvable:$true] %s15
      %18 = dma.hbm_to_vmem [thread:$0]  %s0, 128, %s16, [#allocation3]
    $region5: #{tpu_custom_call.1} parent=1 // pred_fallthru
      _
    // Predicated region
    $region6: #{tpu_custom_call.1} parent=1 // pred_check
      _
    $region7: #{tpu_custom_call.1} parent=1 // pred_check_branch
      %20 = sbr.rel (0) target = $region9
    $region8: #{tpu_custom_call.1} parent=1 // pred_region
      %s22 = ssub.s32 512, 512
      %23 = vsyncadd [#allocation5], %s22
      %s24 = sshll.u32 [#allocation4], 4
      %s25 = int_to_ptr.vmem [resolvable:$true] %s24
      %30 = dma.hbm_to_vmem [thread:$0]  %s1, 512, %s25, [#allocation5], 256, 256, 16
    $region9: #{tpu_custom_call.1} parent=1 // pred_fallthru
      _
    // Predicated region
    $region10: #{tpu_custom_call.1} parent=1 // pred_check
      _
    $region11: #{tpu_custom_call.1} parent=1 // pred_check_branch
      %32 = sbr.rel (0) target = $region13
    $region12: #{tpu_custom_call.1} parent=1 // pred_region
      %33 = dma.done [#allocation3], 128
    $region13: #{tpu_custom_call.1} parent=1 // pred_fallthru
      _
    // Predicated region
    $region14: #{tpu_custom_call.1} parent=1 // pred_check
      _
    $region15: #{tpu_custom_call.1} parent=1 // pred_check_branch
      %35 = sbr.rel (0) target = $region17
    $region16: #{tpu_custom_call.1} parent=1 // pred_region
      %36 = dma.done [#allocation5], 512
    $region17: #{tpu_custom_call.1} parent=1 // pred_fallthru
      _
    %v37 = vld [vmem:[#allocation2] sm:$0xff]
    %v38 = vld [vmem:[#allocation4] sm:$0xff]
    %v39 = vld [vmem:[#allocation4 + $0x8] sm:$0xff]
    %v40 = vld [vmem:[#allocation4 + $0x10] sm:$0xff]
    %v41 = vld [vmem:[#allocation4 + $0x18] sm:$0xff]
    %vm42 = vcmask 130048
    %v44 = vsel %vm42, %v37, 0
    %46 = vmatprep.subr.mxu0 0.0
    %47 = vmatpush1.msra.mxu0 0.0
    %48 = vmatprep.subr.mxu0 0.0
    %49 = vmatpush1.msra.mxu0 0.0
    %50 = vmatprep.subr.mxu0 0.0
    %51 = vmatpush1.msra.mxu0 0.0
    %52 = vmatprep.subr.mxu0 0.0
    %53 = vmatpush1.msra.mxu0 0.0
    %54 = vmatprep.subr.mxu0 0.0
    %55 = vmatpush1.msra.mxu0 0.0
    %56 = vmatprep.subr.mxu0 0.0
    %57 = vmatpush1.msra.mxu0 0.0
    %58 = vmatprep.subr.mxu0 0.0
    %59 = vmatpush1.msra.mxu0 0.0
    %60 = vmatprep.subr.mxu0 0.0
    %61 = vmatpush1.msra.mxu0 0.0
    %62 = vmatprep.subr.mxu0 0.0
    %63 = vmatpush1.msra.mxu0 0.0
    %64 = vmatprep.subr.mxu0 0.0
    %65 = vmatpush1.msra.mxu0 0.0
    %66 = vmatprep.subr.mxu0 0.0
    %67 = vmatpush1.msra.mxu0 0.0
    %68 = vmatprep.subr.mxu0 0.0
    %69 = vmatpush1.msra.mxu0 0.0
    %70 = vmatprep.subr.mxu0 0.0
    %71 = vmatpush1.msra.mxu0 0.0
    %72 = vmatprep.subr.mxu0 0.0
    %73 = vmatpush1.msra.mxu0 0.0
    %74 = vmatprep.subr.mxu0 %v41
    %75 = vmatpush1.msra.mxu0 %v40
    %76 = vmatprep.subr.mxu0 %v39
    %77 = vmatpush1.msra.mxu0 %v38
    %78 = vmatprep.subr.mxu0 0.0
    %79 = vmatpush2.msra.mxu0 0.0
    %80 = vmatprep.subr.mxu0 0.0
    %81 = vmatpush2.msra.mxu0 0.0
    %82 = vmatprep.subr.mxu0 0.0
    %83 = vmatpush2.msra.mxu0 0.0
    %84 = vmatprep.subr.mxu0 0.0
    %85 = vmatpush2.msra.mxu0 0.0
    %86 = vmatprep.subr.mxu0 0.0
    %87 = vmatpush2.msra.mxu0 0.0
    %88 = vmatprep.subr.mxu0 0.0
    %89 = vmatpush2.msra.mxu0 0.0
    %90 = vmatprep.subr.mxu0 0.0
    %91 = vmatpush2.msra.mxu0 0.0
    %92 = vmatprep.subr.mxu0 0.0
    %93 = vmatpush2.msra.mxu0 0.0
    %94 = vmatprep.subr.mxu0 0.0
    %95 = vmatpush2.msra.mxu0 0.0
    %96 = vmatprep.subr.mxu0 0.0
    %97 = vmatpush2.msra.mxu0 0.0
    %98 = vmatprep.subr.mxu0 0.0
    %99 = vmatpush2.msra.mxu0 0.0
    %100 = vmatprep.subr.mxu0 0.0
    %101 = vmatpush2.msra.mxu0 0.0
    %102 = vmatprep.subr.mxu0 0.0
    %103 = vmatpush2.msra.mxu0 0.0
    %104 = vmatprep.subr.mxu0 0.0
    %105 = vmatpush2.msra.mxu0 0.0
    %106 = vmatprep.subr.mxu0 0.0
    %107 = vmatpush2.msra.mxu0 0.0
    %108 = vmatprep.subr.mxu0 0.0
    %109 = vmatpush2.msra.mxu0 0.0
    %110 = vmatprep.mubr.f32.mxu0 0.0
    %111 = vmatmul.mubr.f32.gmra.mxu0 %v44
    %v112 = vpop.f32.mrf.mxu0
    %v113 = vadd.f32 0.0, %v112
    %v114 = vpop.f32.mrf.mxu0
    %v115 = vadd.f32 0.0, %v114
    %116 = vdwg.mxu0
    %v117 = vadd.f32 %v115, 1.0
    %v118 = vrcp.pop %v117
    %v119 = vmul.f32 %v113, %v118
    %vm120 = vcmask 31744
    %121 = vst.msk [vmem:[%s2] sm:$0xff] %vm120, %v119
    // Predicated region
    $region18: #{tpu_custom_call.1} parent=1 // pred_check
      _
    $region19: #{tpu_custom_call.1} parent=1 // pred_check_branch
      %123 = sbr.rel (0) target = $region21
    $region20: #{tpu_custom_call.1} parent=1 // pred_region
      _
    $region21: #{tpu_custom_call.1} parent=1 // pred_fallthru
      _
    // Predicated region
    $region22: #{tpu_custom_call.1} parent=1 // pred_check
      _
    $region23: #{tpu_custom_call.1} parent=1 // pred_check_branch
      %125 = sbr.rel (0) target = $region25
    $region24: #{tpu_custom_call.1} parent=1 // pred_region
      _
    $region25: #{tpu_custom_call.1} parent=1 // pred_fallthru
      _
    %126 = vsyncpa [#allocation3], 1
    %127 = vsyncpa [#allocation5], 1

</llo_original>
